<compile_context>
chip_gen: v6e
topology: v6e:2x2x1
jax: 0.10.0
libtpu: 0.0.40
codegen_flags: <defaults>
</compile_context>

<pallas_src>
import functools

import jax
import jax.numpy as jnp
from jax.experimental import pallas as pl
from jax.experimental.pallas import tpu as pltpu

L = 64                       # number of feature locations (fixed by the module's reshape)
_MIB = 1024 * 1024


def _attention_kernel(feat_ref, hid_ref,
                      wf_ref, bf_ref, wh_ref, bh_ref, ws_ref, bs_ref,
                      ctx_ref, attw_ref, *, n_chunks):
    # Block shapes per grid step:
    #   feat_ref : (BB, L, F)     hid_ref : (BB, H)
    #   wf_ref   : (F, A)         bf_ref  : (1, A)
    #   wh_ref   : (H, A)         bh_ref  : (1, A)
    #   ws_ref   : (1, A)         bs_ref  : (1,)  scalar in SMEM
    #   ctx_ref  : (BB, F)        attw_ref: (BB, L)
    BB, Lq, F = feat_ref.shape
    A = wf_ref.shape[1]
    CL = Lq // n_chunks

    feat = feat_ref[...]                                        # (BB, L, F), native dtype
    wf = wf_ref[...].astype(feat.dtype)                         # MXU runs at feature precision
    ws_row = ws_ref[...][None, :, :]                            # (1, 1, A)

    # Hidden projection: (BB, H) @ (H, A) on the MXU, f32 accumulation.
    hid_proj = (jnp.dot(hid_ref[...], wh_ref[...],
                        preferred_element_type=jnp.float32)
                + bh_ref[...])                                  # (BB, A)

    # Scores, chunked over the 64 locations so the live f32 temporaries
    # (feat_proj / tanh of shape (BB, CL, A)) stay bounded even for large A.
    score_chunks = []
    for c in range(n_chunks):
        fc = feat[:, c * CL:(c + 1) * CL, :]                    # (BB, CL, F)
        fp = (jnp.dot(fc.reshape(BB * CL, F), wf,
                      preferred_element_type=jnp.float32)
              + bf_ref[...])                                    # (BB*CL, A)
        t = jnp.tanh(fp.reshape(BB, CL, A) + hid_proj[:, None, :])   # (BB, CL, A)
        # score = <t, w_score> over A: VPU multiply + lane reduction.  Avoids an
        # N=1 MXU matmul and the cross-lane (BB*CL, 1) -> (BB, CL) relayout.
        score_chunks.append(jnp.sum(t * ws_row, axis=-1))       # (BB, CL)
    score = score_chunks[0] if n_chunks == 1 else jnp.concatenate(score_chunks, axis=1)
    score = score + bs_ref[0]                                   # (BB, L), lane-major

    # Numerically stable softmax over the 64 locations (cheap lane reductions).
    m = jnp.max(score, axis=1, keepdims=True)                   # (BB, 1)
    e = jnp.exp(score - m)                                      # (BB, L)
    w = e / jnp.sum(e, axis=1, keepdims=True)                   # (BB, L)

    # Context = attention-weighted sum of the ORIGINAL features: VPU multiply +
    # sublane (XLU) reduce.  An M=1 batched MXU contraction here would push a
    # fresh (64, F) "weight" into the MXU per batch element at ~0% utilization.
    ctx = jnp.sum(w[:, :, None] * feat.astype(jnp.float32), axis=1)   # (BB, F)

    ctx_ref[...] = ctx.astype(ctx_ref.dtype)
    attw_ref[...] = w.astype(attw_ref.dtype)


def _choose_n_chunks(A):
    """Bound the live (BB, CL, A) f32 temporaries; only chunk when A is large."""
    if A <= 128:
        return 1
    if A <= 256:
        return 2
    if A <= 512:
        return 4
    return 8


def _vmem_budget():
    """Generation-aware targets:
    (per-step working-set budget, vmem_limit_bytes, ensure >= 2 grid steps)."""
    try:
        cap = pltpu.get_tpu_info().vmem_capacity_bytes
    except Exception:                       # no info available: assume the smallest core
        cap = 64 * _MIB
    if cap <= 64 * _MIB:                    # v7x-class: 64 MiB per TC, 2 TCs per chip
        return 22 * _MIB, 40 * _MIB, True
    return 44 * _MIB, 64 * _MIB, False      # v5e / v6e: 128 MiB physical, 1 TC


def _choose_block_b(B, F, H, A, n_chunks, feat_itemsize, budget, two_steps):
    """Batch tile: as large as the fully-accounted VMEM budget allows, a
    multiple of 8 (layout rule), preferring exact divisors of B (no pad copy of
    the dominant feature tensor), and small enough that a v7x chip gets >= 2
    grid steps so the 'parallel' axis shards across both TensorCores."""
    if B <= 8:
        return B
    CL = L // n_chunks
    per_elem = (2 * L * F * feat_itemsize        # double-buffered feature tile (dominant)
                + 2 * (F + L) * 4                # double-buffered ctx / attw outputs
                + 2 * H * 4                      # double-buffered hidden tile
                + (2 * CL * A                    # feat_proj + tanh chunk temporaries (f32)
                   + L * F                       # w * features product before the L-reduce
                   + 2 * A + 8 * L) * 4)         # hidden proj, score / softmax vectors
    resident = 2 * ((F + H + 4) * A + 2 * L) * 4   # resident weights/biases (x2, conservative)
    avail = budget - resident - 2 * _MIB           # compiler-internal scratch headroom
    cap = max(8, min(1024, avail // per_elem))
    if two_steps and B >= 16:
        cap = min(cap, ((B + 1) // 2 + 7) // 8 * 8)   # guarantee >= 2 grid steps (megacore)
    cap = max(8, (cap // 8) * 8)
    if B <= cap and not (two_steps and B >= 16):
        return B                                      # whole batch in a single step
    for d in range(cap, 7, -8):                       # largest multiple-of-8 divisor of B
        if B % d == 0:
            return d
    return cap                                        # ragged batch: wrapper pads (rare)


@functools.partial(jax.jit, static_argnames=("block_b", "feature_compute_dtype"))
def attention_forward(features, hidden, params, block_b=None,
                      feature_compute_dtype=None):
    """features: (B, 64, F); hidden: (B, H).
    Returns (context (B, F) f32, attention_weights (B, 64) f32).
    feature_compute_dtype=jnp.bfloat16 halves the dominant HBM read (optional)."""
    B, Lf, F = features.shape
    assert Lf == L
    H = hidden.shape[-1]
    wf, bf, wh, bh, ws, bs = params
    A = wf.shape[1]

    if feature_compute_dtype is not None:            # optional bf16 feature path
        features = features.astype(feature_compute_dtype)

    n_chunks = _choose_n_chunks(A)
    budget, vmem_limit, two_steps = _vmem_budget()
    BB = (_choose_block_b(B, F, H, A, n_chunks, features.dtype.itemsize,
                          budget, two_steps)
          if block_b is None else block_b)
    nb = pl.cdiv(B, BB)
    Bp = nb * BB
    if Bp != B:    # rare fallback; _choose_block_b prefers exact divisors of B
        pad = Bp - B
        features = jnp.pad(features, ((0, pad), (0, 0), (0, 0)))
        hidden = jnp.pad(hidden, ((0, pad), (0, 0)))

    bf2 = bf.reshape(1, A)
    bh2 = bh.reshape(1, A)
    ws2 = ws.reshape(1, A)            # score weight as a lane-dense row
    bs1 = bs.reshape(1)               # scalar bias -> SMEM

    full = lambda b: (0, 0)           # weights: same resident block every grid step

    kernel = functools.partial(_attention_kernel, n_chunks=n_chunks)

    ctx, attw = pl.pallas_call(
        kernel,
        out_shape=(jax.ShapeDtypeStruct((Bp, F), jnp.float32),
                   jax.ShapeDtypeStruct((Bp, L), jnp.float32)),
        grid_spec=pltpu.PrefetchScalarGridSpec(
            num_scalar_prefetch=0,
            grid=(nb,),
            in_specs=[
                pl.BlockSpec((BB, L, F), lambda b: (b, 0, 0)),      # features
                pl.BlockSpec((BB, H), lambda b: (b, 0)),            # hidden
                pl.BlockSpec((F, A), full),                         # W_feat   (in, out)
                pl.BlockSpec((1, A), full),                         # b_feat
                pl.BlockSpec((H, A), full),                         # W_hidden (in, out)
                pl.BlockSpec((1, A), full),                         # b_hidden
                pl.BlockSpec((1, A), full),                         # W_score row
                pl.BlockSpec(memory_space=pltpu.MemorySpace.SMEM),  # b_score scalar
            ],
            out_specs=[
                pl.BlockSpec((BB, F), lambda b: (b, 0)),            # context
                pl.BlockSpec((BB, L), lambda b: (b, 0)),            # attention weights
            ],
        ),
        compiler_params=pltpu.CompilerParams(
            dimension_semantics=("parallel",),
            vmem_limit_bytes=int(vmem_limit)),
    )(features, hidden, wf, bf2, wh, bh2, ws2, bs1)

    if Bp != B:
        ctx = ctx[:B]
        attw = attw[:B]
    return ctx, attw


def init_params(key, feature_dim, hidden_dim, attention_dim):
    """Deterministic synthetic params. Stored pre-transposed: W has shape (in, out)."""
    ks = jax.random.split(key, 6)

    def lin(kw, kb, fan_in, fan_out):
        bound = 1.0 / jnp.sqrt(fan_in)
        w = jax.random.uniform(kw, (fan_in, fan_out), jnp.float32, -bound, bound)
        b = jax.random.uniform(kb, (fan_out,), jnp.float32, -bound, bound)
        return w, b

    wf, bf = lin(ks[0], ks[1], feature_dim, attention_dim)
    wh, bh = lin(ks[2], ks[3], hidden_dim, attention_dim)
    ws, bs = lin(ks[4], ks[5], attention_dim, 1)
    return wf, bf, wh, bh, ws, bs


def _reference(features, hidden, params):
    wf, bf, wh, bh, ws, bs = params
    B = features.shape[0]
    A = wf.shape[1]
    feat_proj = features @ wf + bf                       # (B, L, A)
    hid_proj = (hidden @ wh + bh).reshape(B, 1, A)       # (B, 1, A)
    score = jnp.tanh(feat_proj + hid_proj) @ ws + bs     # (B, L, 1)
    attw = jax.nn.softmax(score, axis=1)                 # (B, L, 1)
    ctx = jnp.sum(attw * features, axis=1)               # (B, F)
    return ctx, attw[..., 0]


if __name__ == "__main__":
    B, feature_dim, hidden_dim, attention_dim = 2, 32, 32, 16

    key = jax.random.PRNGKey(0)
    k_feat, k_hid, k_param = jax.random.split(key, 3)
    features = jax.random.normal(k_feat, (B, L, feature_dim), jnp.float32)
    hidden = jax.random.normal(k_hid, (B, hidden_dim), jnp.float32)
    params = init_params(k_param, feature_dim, hidden_dim, attention_dim)

    ctx, attw = attention_forward(features, hidden, params)
    jax.block_until_ready((ctx, attw))

    ctx_ref, attw_ref = _reference(features, hidden, params)
    assert ctx.shape == (B, feature_dim) and attw.shape == (B, L)
    assert jnp.allclose(ctx, ctx_ref, atol=1e-5, rtol=1e-5)
    assert jnp.allclose(attw, attw_ref, atol=1e-5, rtol=1e-5)

    print("KERNEL_OK")
</pallas_src>

<mosaic_0001>
module attributes {stable_mosaic.version = 11 : i64} {
  func.func @_attention_kernel(%arg0: i32, %arg1: memref<2x64x32xf32, #tpu.memory_space<vmem>>, %arg2: memref<2x32xf32, #tpu.memory_space<vmem>>, %arg3: memref<32x16xf32, #tpu.memory_space<vmem>>, %arg4: memref<1x16xf32, #tpu.memory_space<vmem>>, %arg5: memref<32x16xf32, #tpu.memory_space<vmem>>, %arg6: memref<1x16xf32, #tpu.memory_space<vmem>>, %arg7: memref<1x16xf32, #tpu.memory_space<vmem>>, %arg8: memref<1xf32, #tpu.memory_space<smem>>, %arg9: memref<2x32xf32, #tpu.memory_space<vmem>>, %arg10: memref<2x64xf32, #tpu.memory_space<vmem>>) attributes {dimension_semantics = [#tpu.dimension_semantics<parallel>], iteration_bounds = array<i64: 1>, scalar_prefetch = 0 : i64, scratch_operands = 0 : i64, tpu.core_type = #tpu.core_type<tc>, window_params = [{transform_indices = @transform_0, window_bounds = array<i64: 2, 64, 32>}, {transform_indices = @transform_1, window_bounds = array<i64: 2, 32>}, {pipeline_mode = #tpu.pipeline_mode<synchronous>, transform_indices = @transform_2, window_bounds = array<i64: 32, 16>}, {pipeline_mode = #tpu.pipeline_mode<synchronous>, transform_indices = @transform_3, window_bounds = array<i64: 1, 16>}, {pipeline_mode = #tpu.pipeline_mode<synchronous>, transform_indices = @transform_4, window_bounds = array<i64: 32, 16>}, {pipeline_mode = #tpu.pipeline_mode<synchronous>, transform_indices = @transform_5, window_bounds = array<i64: 1, 16>}, {pipeline_mode = #tpu.pipeline_mode<synchronous>, transform_indices = @transform_6, window_bounds = array<i64: 1, 16>}, {transform_indices = @transform_7, window_bounds = array<i64: 1>}, {transform_indices = @transform_8, window_bounds = array<i64: 2, 32>}, {transform_indices = @transform_9, window_bounds = array<i64: 2, 64>}]} {
    %c0 = arith.constant 0 : index
    %c0_0 = arith.constant 0 : index
    %c0_1 = arith.constant 0 : index
    %0 = vector.load %arg1[%c0, %c0_0, %c0_1] : memref<2x64x32xf32, #tpu.memory_space<vmem>>, vector<2x64x32xf32>
    %c0_2 = arith.constant 0 : index
    %c0_3 = arith.constant 0 : index
    %1 = vector.load %arg3[%c0_2, %c0_3] : memref<32x16xf32, #tpu.memory_space<vmem>>, vector<32x16xf32>
    %c0_4 = arith.constant 0 : index
    %c0_5 = arith.constant 0 : index
    %2 = vector.load %arg7[%c0_4, %c0_5] : memref<1x16xf32, #tpu.memory_space<vmem>>, vector<1x16xf32>
    %3 = vector.shape_cast %2 : vector<1x16xf32> to vector<1x1x16xf32>
    %c0_6 = arith.constant 0 : index
    %c0_7 = arith.constant 0 : index
    %4 = vector.load %arg2[%c0_6, %c0_7] : memref<2x32xf32, #tpu.memory_space<vmem>>, vector<2x32xf32>
    %c0_8 = arith.constant 0 : index
    %c0_9 = arith.constant 0 : index
    %5 = vector.load %arg5[%c0_8, %c0_9] : memref<32x16xf32, #tpu.memory_space<vmem>>, vector<32x16xf32>
    %cst = arith.constant dense<0.000000e+00> : vector<2x16xf32>
    %6 = tpu.matmul %4, %5, %cst {dimension_numbers = #tpu.dot_dimension_numbers<[1], [0], [0], [1], [0, 0, 1, 1], [], []>} : vector<2x32xf32>, vector<32x16xf32>, vector<2x16xf32> -> vector<2x16xf32>
    %c0_10 = arith.constant 0 : index
    %c0_11 = arith.constant 0 : index
    %7 = vector.load %arg6[%c0_10, %c0_11] : memref<1x16xf32, #tpu.memory_space<vmem>>, vector<1x16xf32>
    %8 = vector.broadcast %7 : vector<1x16xf32> to vector<2x16xf32>
    %9 = arith.addf %6, %8 : vector<2x16xf32>
    %10 = vector.shape_cast %0 : vector<2x64x32xf32> to vector<128x32xf32>
    %cst_12 = arith.constant dense<0.000000e+00> : vector<128x16xf32>
    %11 = tpu.matmul %10, %1, %cst_12 {dimension_numbers = #tpu.dot_dimension_numbers<[1], [0], [0], [1], [0, 0, 1, 1], [], []>} : vector<128x32xf32>, vector<32x16xf32>, vector<128x16xf32> -> vector<128x16xf32>
    %c0_13 = arith.constant 0 : index
    %c0_14 = arith.constant 0 : index
    %12 = vector.load %arg4[%c0_13, %c0_14] : memref<1x16xf32, #tpu.memory_space<vmem>>, vector<1x16xf32>
    %13 = vector.broadcast %12 : vector<1x16xf32> to vector<128x16xf32>
    %14 = arith.addf %11, %13 : vector<128x16xf32>
    %15 = vector.shape_cast %14 : vector<128x16xf32> to vector<2x64x16xf32>
    %16 = vector.shape_cast %9 : vector<2x16xf32> to vector<2x1x16xf32>
    %17 = vector.broadcast %16 : vector<2x1x16xf32> to vector<2x64x16xf32>
    %18 = arith.addf %15, %17 : vector<2x64x16xf32>
    %19 = math.tanh %18 : vector<2x64x16xf32>
    %20 = vector.broadcast %3 : vector<1x1x16xf32> to vector<2x64x16xf32>
    %21 = arith.mulf %19, %20 : vector<2x64x16xf32>
    %cst_15 = arith.constant dense<0.000000e+00> : vector<2x64xf32>
    %22 = vector.multi_reduction <add>, %21, %cst_15 [2] : vector<2x64x16xf32> to vector<2x64xf32>
    %c0_16 = arith.constant 0 : index
    %23 = memref.load %arg8[%c0_16] : memref<1xf32, #tpu.memory_space<smem>>
    %24 = vector.broadcast %23 : f32 to vector<2x64xf32>
    %25 = arith.addf %22, %24 : vector<2x64xf32>
    %cst_17 = arith.constant dense<0xFF800000> : vector<2xf32>
    %26 = vector.multi_reduction <maximumf>, %25, %cst_17 [1] : vector<2x64xf32> to vector<2xf32>
    %27 = vector.shape_cast %26 : vector<2xf32> to vector<2x1xf32>
    %28 = vector.broadcast %27 : vector<2x1xf32> to vector<2x64xf32>
    %29 = arith.subf %25, %28 : vector<2x64xf32>
    %30 = math.exp %29 : vector<2x64xf32>
    %cst_18 = arith.constant dense<0.000000e+00> : vector<2xf32>
    %31 = vector.multi_reduction <add>, %30, %cst_18 [1] : vector<2x64xf32> to vector<2xf32>
    %32 = vector.shape_cast %31 : vector<2xf32> to vector<2x1xf32>
    %33 = vector.broadcast %32 : vector<2x1xf32> to vector<2x64xf32>
    %34 = arith.divf %30, %33 : vector<2x64xf32>
    %35 = vector.shape_cast %34 : vector<2x64xf32> to vector<2x64x1xf32>
    %36 = vector.broadcast %35 : vector<2x64x1xf32> to vector<2x64x32xf32>
    %37 = arith.mulf %36, %0 : vector<2x64x32xf32>
    %cst_19 = arith.constant dense<0.000000e+00> : vector<2x32xf32>
    %38 = vector.multi_reduction <add>, %37, %cst_19 [1] : vector<2x64x32xf32> to vector<2x32xf32>
    %c0_20 = arith.constant 0 : index
    %c0_21 = arith.constant 0 : index
    %39 = vector.load %arg9[%c0_20, %c0_21] : memref<2x32xf32, #tpu.memory_space<vmem>>, vector<2x32xf32>
    tpu.vector_store %arg9[%c0_20, %c0_21], %38 {strides = array<i32>} : memref<2x32xf32, #tpu.memory_space<vmem>>, vector<2x32xf32>,
    %c0_22 = arith.constant 0 : index
    %c0_23 = arith.constant 0 : index
    %40 = vector.load %arg10[%c0_22, %c0_23] : memref<2x64xf32, #tpu.memory_space<vmem>>, vector<2x64xf32>
    tpu.vector_store %arg10[%c0_22, %c0_23], %34 {strides = array<i32>} : memref<2x64xf32, #tpu.memory_space<vmem>>, vector<2x64xf32>,
    return
  }
  func.func @transform_0(%arg0: i32) -> (i32, i32, i32) {
    %c0_i32 = arith.constant 0 : i32
    %c0_i32_0 = arith.constant 0 : i32
    %c0_i32_1 = arith.constant 0 : i32
    return %arg0, %c0_i32, %c0_i32_0 : i32, i32, i32
  }
  func.func @transform_1(%arg0: i32) -> (i32, i32) {
    %c0_i32 = arith.constant 0 : i32
    %c0_i32_0 = arith.constant 0 : i32
    return %arg0, %c0_i32 : i32, i32
  }
  func.func @transform_2(%arg0: i32) -> (i32, i32) {
    %c0_i32 = arith.constant 0 : i32
    %c0_i32_0 = arith.constant 0 : i32
    %c0_i32_1 = arith.constant 0 : i32
    return %c0_i32, %c0_i32_0 : i32, i32
  }
  func.func @transform_3(%arg0: i32) -> (i32, i32) {
    %c0_i32 = arith.constant 0 : i32
    %c0_i32_0 = arith.constant 0 : i32
    %c0_i32_1 = arith.constant 0 : i32
    return %c0_i32, %c0_i32_0 : i32, i32
  }
  func.func @transform_4(%arg0: i32) -> (i32, i32) {
    %c0_i32 = arith.constant 0 : i32
    %c0_i32_0 = arith.constant 0 : i32
    %c0_i32_1 = arith.constant 0 : i32
    return %c0_i32, %c0_i32_0 : i32, i32
  }
  func.func @transform_5(%arg0: i32) -> (i32, i32) {
    %c0_i32 = arith.constant 0 : i32
    %c0_i32_0 = arith.constant 0 : i32
    %c0_i32_1 = arith.constant 0 : i32
    return %c0_i32, %c0_i32_0 : i32, i32
  }
  func.func @transform_6(%arg0: i32) -> (i32, i32) {
    %c0_i32 = arith.constant 0 : i32
    %c0_i32_0 = arith.constant 0 : i32
    %c0_i32_1 = arith.constant 0 : i32
    return %c0_i32, %c0_i32_0 : i32, i32
  }
  func.func @transform_7(%arg0: i32) -> i32 {
    %c0_i32 = arith.constant 0 : i32
    %c0_i32_0 = arith.constant 0 : i32
    return %c0_i32 : i32
  }
  func.func @transform_8(%arg0: i32) -> (i32, i32) {
    %c0_i32 = arith.constant 0 : i32
    %c0_i32_0 = arith.constant 0 : i32
    return %arg0, %c0_i32 : i32, i32
  }
  func.func @transform_9(%arg0: i32) -> (i32, i32) {
    %c0_i32 = arith.constant 0 : i32
    %c0_i32_0 = arith.constant 0 : i32
    return %arg0, %c0_i32 : i32, i32
  }
}

</mosaic_0001>

<llo_original>
// kernel: attention_forward.1
$region0: #{attention_forward.1}
  #allocation0 [shape = 'u32[]', space=smem, size = 0x4, offset = 0x4, fixed_abs, tag = 'smem constant byte address 0x4 - core index']
  #allocation1 [shape = 'u32[144,128]{1,0:T(1,128)}', space=vmem, size = 0x12000, scoped, tag = 'internal scratch']
  #allocation2 [shape = 'f32[1]{0:T(128)S(6)}', space=smem, size = 0x200, scoped, tag = 'scoped memory for attention_forward.1']
  %s0 = inlined_call_operand.vmem [shape: f32[2,64,32], index: 0, kind: input, shape index: {}]
  %s1 = inlined_call_operand.vmem [shape: f32[2,32], index: 1, kind: input, shape index: {}]
  %s2 = inlined_call_operand.vmem [shape: f32[32,16], index: 2, kind: input, shape index: {}]
  %s3 = inlined_call_operand.vmem [shape: f32[1,16], index: 3, kind: input, shape index: {}]
  %s4 = inlined_call_operand.vmem [shape: f32[32,16], index: 4, kind: input, shape index: {}]
  %s5 = inlined_call_operand.vmem [shape: f32[1,16], index: 5, kind: input, shape index: {}]
  %s6 = inlined_call_operand.vmem [shape: f32[1,16], index: 6, kind: input, shape index: {}]
  %s7 = inlined_call_operand.<no memory space> [shape: f32[1], index: 7, kind: input, shape index: {}]
  %s8 = inlined_call_operand.hbm [shape: f32[2,32], index: 8, kind: output, shape index: {0}]
  %s9 = inlined_call_operand.hbm [shape: f32[2,64], index: 9, kind: output, shape index: {1}]
  %10 = xla_tuple %s8, %s9
  %s11 = sld [smem:[#allocation0]]
  $region50: #{attention_forward.1} parent=0
    _
  %s13 = ssub.s32 1, %s11
  %s14 = scalar_select 0, %s13, %s11
  %15 = sst [smem:[#allocation2]] %s7
  $region1: #{attention_forward.1} parent=0
    #allocation3 [shape = 'u8[1024]{0}', space=vmem, size = 0x400, scoped, tag = 'output window, operand 0, single buffered']
    #allocation4 [shape = 's32[1]{0}', space=sflag, size = 0x4, scoped, tag = 'scoped memory for attention_forward.1']
    #allocation5 [shape = 'u8[1024]{0}', space=vmem, size = 0x400, scoped, tag = 'output window, operand 1, single buffered']
    #allocation6 [shape = 's32[1]{0}', space=sflag, size = 0x4, scoped, tag = 'scoped memory for attention_forward.1']
    %16 = vsyncpa [#allocation4], 0
    %17 = vsyncpa [#allocation6], 0
    // Predicated region
    $region2: #{attention_forward.1} parent=1 // pred_check
      _
    $region3: #{attention_forward.1} parent=1 // pred_check_branch
      %19 = sbr.rel (0) target = $region5
    $region4: #{attention_forward.1} parent=1 // pred_region
      _
    $region5: #{attention_forward.1} parent=1 // pred_fallthru
      _
    // Predicated region
    $region6: #{attention_forward.1} parent=1 // pred_check
      _
    $region7: #{attention_forward.1} parent=1 // pred_check_branch
      %21 = sbr.rel (0) target = $region9
    $region8: #{attention_forward.1} parent=1 // pred_region
      _
    $region9: #{attention_forward.1} parent=1 // pred_fallthru
      _
    // Predicated region
    $region10: #{attention_forward.1} parent=1 // pred_check
      _
    $region11: #{attention_forward.1} parent=1 // pred_check_branch
      %23 = sbr.rel (0) target = $region13
    $region12: #{attention_forward.1} parent=1 // pred_region
      _
    $region13: #{attention_forward.1} parent=1 // pred_fallthru
      _
    // Predicated region
    $region14: #{attention_forward.1} parent=1 // pred_check
      _
    $region15: #{attention_forward.1} parent=1 // pred_check_branch
      %25 = sbr.rel (0) target = $region17
    $region16: #{attention_forward.1} parent=1 // pred_region
      _
    $region17: #{attention_forward.1} parent=1 // pred_fallthru
      _
    // Predicated region
    $region18: #{attention_forward.1} parent=1 // pred_check
      _
    $region19: #{attention_forward.1} parent=1 // pred_check_branch
      %27 = sbr.rel (0) target = $region21
    $region20: #{attention_forward.1} parent=1 // pred_region
      _
    $region21: #{attention_forward.1} parent=1 // pred_fallthru
      _
    // Predicated region
    $region22: #{attention_forward.1} parent=1 // pred_check
      _
    $region23: #{attention_forward.1} parent=1 // pred_check_branch
      %29 = sbr.rel (0) target = $region25
    $region24: #{attention_forward.1} parent=1 // pred_region
      _
    $region25: #{attention_forward.1} parent=1 // pred_fallthru
      _
    // Predicated region
    $region26: #{attention_forward.1} parent=1 // pred_check
      _
    $region27: #{attention_forward.1} parent=1 // pred_check_branch
      %31 = sbr.rel (0) target = $region29
    $region28: #{attention_forward.1} parent=1 // pred_region
      _
    $region29: #{attention_forward.1} parent=1 // pred_fallthru
      _
    // Predicated region
    $region30: #{attention_forward.1} parent=1 // pred_check
      _
    $region31: #{attention_forward.1} parent=1 // pred_check_branch
      %33 = sbr.rel (0) target = $region33
    $region32: #{attention_forward.1} parent=1 // pred_region
      _
    $region33: #{attention_forward.1} parent=1 // pred_fallthru
      _
    %v34 = vld [vmem:[%s0] sm:$0xff]
    %v35 = vld [vmem:[%s0 + $0x8] sm:$0xff]
    %v36 = vld [vmem:[%s0 + $0x10] sm:$0xff]
    %v37 = vld [vmem:[%s0 + $0x18] sm:$0xff]
    %v38 = vld [vmem:[%s0 + $0x20] sm:$0xff]
    %v39 = vld [vmem:[%s0 + $0x28] sm:$0xff]
    %v40 = vld [vmem:[%s0 + $0x30] sm:$0xff]
    %v41 = vld [vmem:[%s0 + $0x38] sm:$0xff]
    %v42 = vld [vmem:[%s0 + $0x40] sm:$0xff]
    %v43 = vld [vmem:[%s0 + $0x48] sm:$0xff]
    %v44 = vld [vmem:[%s0 + $0x50] sm:$0xff]
    %v45 = vld [vmem:[%s0 + $0x58] sm:$0xff]
    %v46 = vld [vmem:[%s0 + $0x60] sm:$0xff]
    %v47 = vld [vmem:[%s0 + $0x68] sm:$0xff]
    %v48 = vld [vmem:[%s0 + $0x70] sm:$0xff]
    %v49 = vld [vmem:[%s0 + $0x78] sm:$0xff]
    %v50 = vld [vmem:[%s2] sm:$0xff]
    %v51 = vld [vmem:[%s2 + $0x8] sm:$0xff]
    %v52 = vld [vmem:[%s2 + $0x10] sm:$0xff]
    %v53 = vld [vmem:[%s2 + $0x18] sm:$0xff]
    %v54 = vld [vmem:[%s6] sm:$0x1]
    %v55 = vld [vmem:[%s1] sm:$0x3]
    %v56 = vld [vmem:[%s4] sm:$0xff]
    %v57 = vld [vmem:[%s4 + $0x8] sm:$0xff]
    %v58 = vld [vmem:[%s4 + $0x10] sm:$0xff]
    %v59 = vld [vmem:[%s4 + $0x18] sm:$0xff]
    %v60 = vld [vmem:[%s5] sm:$0x1]
    %v62 = vlaneseq
    %v63 = vshrl.u32 %v62, 7
    %v64 = vsub.s32 0, %v63
    %v65 = vrot.slane %v60, %v64
    %vm67 = vcmask 261120
    %v69 = vsel %vm67, %v55, 0
    %71 = vmatprep.subr.mxu0 0.0
    %72 = vmatpush1.msra.mxu0 0.0
    %73 = vmatprep.subr.mxu0 0.0
    %74 = vmatpush1.msra.mxu0 0.0
    %75 = vmatprep.subr.mxu0 0.0
    %76 = vmatpush1.msra.mxu0 0.0
    %77 = vmatprep.subr.mxu0 0.0
    %78 = vmatpush1.msra.mxu0 0.0
    %79 = vmatprep.subr.mxu0 0.0
    %80 = vmatpush1.msra.mxu0 0.0
    %81 = vmatprep.subr.mxu0 0.0
    %82 = vmatpush1.msra.mxu0 0.0
    %83 = vmatprep.subr.mxu0 0.0
    %84 = vmatpush1.msra.mxu0 0.0
    %85 = vmatprep.subr.mxu0 0.0
    %86 = vmatpush1.msra.mxu0 0.0
    %87 = vmatprep.subr.mxu0 0.0
    %88 = vmatpush1.msra.mxu0 0.0
    %89 = vmatprep.subr.mxu0 0.0
    %90 = vmatpush1.msra.mxu0 0.0
    %91 = vmatprep.subr.mxu0 0.0
    %92 = vmatpush1.msra.mxu0 0.0
    %93 = vmatprep.subr.mxu0 0.0
    %94 = vmatpush1.msra.mxu0 0.0
    %95 = vmatprep.subr.mxu0 0.0
    %96 = vmatpush1.msra.mxu0 %v59
    %97 = vmatprep.subr.mxu0 0.0
    %98 = vmatpush1.msra.mxu0 %v58
    %99 = vmatprep.subr.mxu0 0.0
    %100 = vmatpush1.msra.mxu0 %v57
    %101 = vmatprep.subr.mxu0 0.0
    %102 = vmatpush1.msra.mxu0 %v56
    %103 = vmatprep.subr.mxu0 0.0
    %104 = vmatpush2.msra.mxu0 0.0
    %105 = vmatprep.subr.mxu0 0.0
    %106 = vmatpush2.msra.mxu0 0.0
    %107 = vmatprep.subr.mxu0 0.0
    %108 = vmatpush2.msra.mxu0 0.0
    %109 = vmatprep.subr.mxu0 0.0
    %110 = vmatpush2.msra.mxu0 0.0
    %111 = vmatprep.subr.mxu0 0.0
    %112 = vmatpush2.msra.mxu0 0.0
    %113 = vmatprep.subr.mxu0 0.0
    %114 = vmatpush2.msra.mxu0 0.0
    %115 = vmatprep.subr.mxu0 0.0
    %116 = vmatpush2.msra.mxu0 0.0
    %117 = vmatprep.subr.mxu0 0.0
    %118 = vmatpush2.msra.mxu0 0.0
    %119 = vmatprep.subr.mxu0 0.0
    %120 = vmatpush2.msra.mxu0 0.0
    %121 = vmatprep.subr.mxu0 0.0
    %122 = vmatpush2.msra.mxu0 0.0
    %123 = vmatprep.subr.mxu0 0.0
    %124 = vmatpush2.msra.mxu0 0.0
    %125 = vmatprep.subr.mxu0 0.0
    %126 = vmatpush2.msra.mxu0 0.0
    %127 = vmatprep.subr.mxu0 0.0
    %128 = vmatpush2.msra.mxu0 0.0
    %129 = vmatprep.subr.mxu0 0.0
    %130 = vmatpush2.msra.mxu0 0.0
    %131 = vmatprep.subr.mxu0 0.0
    %132 = vmatpush2.msra.mxu0 0.0
    %133 = vmatprep.subr.mxu0 0.0
    %134 = vmatpush2.msra.mxu0 0.0
    %135 = vmatprep.mubr.f32.mxu0 0.0
    %136 = vmatmul.mubr.f32.gmra.mxu0 %v69
    %v137 = vpop.f32.mrf.mxu0
    %v138 = vadd.f32 %v65, %v137
    %v139 = vpop.f32.mrf.mxu0
    %140 = vdwg.mxu0
    %v141 = vld [vmem:[%s3] sm:$0x1]
    %v143 = vlaneseq
    %v144 = vshrl.u32 %v143, 7
    %v145 = vsub.s32 0, %v144
    %v146 = vrot.slane %v141, %v145
    %v149 = vsel %vm67, %v34, 0
    %v152 = vsel %vm67, %v35, 0
    %v155 = vsel %vm67, %v36, 0
    %v158 = vsel %vm67, %v37, 0
    %v161 = vsel %vm67, %v38, 0
    %v164 = vsel %vm67, %v39, 0
    %v167 = vsel %vm67, %v40, 0
    %v170 = vsel %vm67, %v41, 0
    %v173 = vsel %vm67, %v42, 0
    %v176 = vsel %vm67, %v43, 0
    %v179 = vsel %vm67, %v44, 0
    %v182 = vsel %vm67, %v45, 0
    %v185 = vsel %vm67, %v46, 0
    %v188 = vsel %vm67, %v47, 0
    %v191 = vsel %vm67, %v48, 0
    %v194 = vsel %vm67, %v49, 0
    %196 = vmatprep.subr.mxu0 0.0
    %197 = vmatpush1.msra.mxu0 0.0
    %198 = vmatprep.subr.mxu0 0.0
    %199 = vmatpush1.msra.mxu0 0.0
    %200 = vmatprep.subr.mxu0 0.0
    %201 = vmatpush1.msra.mxu0 0.0
    %202 = vmatprep.subr.mxu0 0.0
    %203 = vmatpush1.msra.mxu0 0.0
    %204 = vmatprep.subr.mxu0 0.0
    %205 = vmatpush1.msra.mxu0 0.0
    %206 = vmatprep.subr.mxu0 0.0
    %207 = vmatpush1.msra.mxu0 0.0
    %208 = vmatprep.subr.mxu0 0.0
    %209 = vmatpush1.msra.mxu0 0.0
    %210 = vmatprep.subr.mxu0 0.0
    %211 = vmatpush1.msra.mxu0 0.0
    %212 = vmatprep.subr.mxu0 0.0
    %213 = vmatpush1.msra.mxu0 0.0
    %214 = vmatprep.subr.mxu0 0.0
    %215 = vmatpush1.msra.mxu0 0.0
    %216 = vmatprep.subr.mxu0 0.0
    %217 = vmatpush1.msra.mxu0 0.0
    %218 = vmatprep.subr.mxu0 0.0
    %219 = vmatpush1.msra.mxu0 0.0
    %220 = vmatprep.subr.mxu0 0.0
    %221 = vmatpush1.msra.mxu0 %v53
    %222 = vmatprep.subr.mxu0 0.0
    %223 = vmatpush1.msra.mxu0 %v52
    %224 = vmatprep.subr.mxu0 0.0
    %225 = vmatpush1.msra.mxu0 %v51
    %226 = vmatprep.subr.mxu0 0.0
    %227 = vmatpush1.msra.mxu0 %v50
    %228 = vmatprep.subr.mxu0 0.0
    %229 = vmatpush2.msra.mxu0 0.0
    %230 = vmatprep.subr.mxu0 0.0
    %231 = vmatpush2.msra.mxu0 0.0
    %232 = vmatprep.subr.mxu0 0.0
    %233 = vmatpush2.msra.mxu0 0.0
    %234 = vmatprep.subr.mxu0 0.0
    %235 = vmatpush2.msra.mxu0 0.0
    %236 = vmatprep.subr.mxu0 0.0
    %237 = vmatpush2.msra.mxu0 0.0
    %238 = vmatprep.subr.mxu0 0.0
    %239 = vmatpush2.msra.mxu0 0.0
    %240 = vmatprep.subr.mxu0 0.0
    %241 = vmatpush2.msra.mxu0 0.0
    %242 = vmatprep.subr.mxu0 0.0
    %243 = vmatpush2.msra.mxu0 0.0
    %244 = vmatprep.subr.mxu0 0.0
    %245 = vmatpush2.msra.mxu0 0.0
    %246 = vmatprep.subr.mxu0 0.0
    %247 = vmatpush2.msra.mxu0 0.0
    %248 = vmatprep.subr.mxu0 0.0
    %249 = vmatpush2.msra.mxu0 0.0
    %250 = vmatprep.subr.mxu0 0.0
    %251 = vmatpush2.msra.mxu0 0.0
    %252 = vmatprep.subr.mxu0 0.0
    %253 = vmatpush2.msra.mxu0 0.0
    %254 = vmatprep.subr.mxu0 0.0
    %255 = vmatpush2.msra.mxu0 0.0
    %256 = vmatprep.subr.mxu0 0.0
    %257 = vmatpush2.msra.mxu0 0.0
    %258 = vmatprep.subr.mxu0 0.0
    %259 = vmatpush2.msra.mxu0 0.0
    %260 = vmatprep.mubr.f32.mxu0 0.0
    %261 = vmatmul.mubr.f32.gmra.mxu0 %v149
    %v262 = vpop.f32.mrf.mxu0
    %v263 = vadd.f32 %v146, %v262
    %v264 = vpop.f32.mrf.mxu0
    %265 = vmatprep.mubr.f32.mxu0 0.0
    %266 = vmatmul.mubr.f32.gmra.mxu0 %v152
    %v267 = vpop.f32.mrf.mxu0
    %v268 = vadd.f32 %v146, %v267
    %v269 = vpop.f32.mrf.mxu0
    %270 = vmatprep.mubr.f32.mxu0 0.0
    %271 = vmatmul.mubr.f32.gmra.mxu0 %v155
    %v272 = vpop.f32.mrf.mxu0
    %v273 = vadd.f32 %v146, %v272
    %v274 = vpop.f32.mrf.mxu0
    %275 = vmatprep.mubr.f32.mxu0 0.0
    %276 = vmatmul.mubr.f32.gmra.mxu0 %v158
    %v277 = vpop.f32.mrf.mxu0
    %v278 = vadd.f32 %v146, %v277
    %v279 = vpop.f32.mrf.mxu0
    %280 = vmatprep.mubr.f32.mxu0 0.0
    %281 = vmatmul.mubr.f32.gmra.mxu0 %v161
    %v282 = vpop.f32.mrf.mxu0
    %v283 = vadd.f32 %v146, %v282
    %v284 = vpop.f32.mrf.mxu0
    %285 = vmatprep.mubr.f32.mxu0 0.0
    %286 = vmatmul.mubr.f32.gmra.mxu0 %v164
    %v287 = vpop.f32.mrf.mxu0
    %v288 = vadd.f32 %v146, %v287
    %v289 = vpop.f32.mrf.mxu0
    %290 = vmatprep.mubr.f32.mxu0 0.0
    %291 = vmatmul.mubr.f32.gmra.mxu0 %v167
    %v292 = vpop.f32.mrf.mxu0
    %v293 = vadd.f32 %v146, %v292
    %v294 = vpop.f32.mrf.mxu0
    %295 = vmatprep.mubr.f32.mxu0 0.0
    %296 = vmatmul.mubr.f32.gmra.mxu0 %v170
    %v297 = vpop.f32.mrf.mxu0
    %v298 = vadd.f32 %v146, %v297
    %v299 = vpop.f32.mrf.mxu0
    %300 = vmatprep.mubr.f32.mxu0 0.0
    %301 = vmatmul.mubr.f32.gmra.mxu0 %v173
    %v302 = vpop.f32.mrf.mxu0
    %v303 = vadd.f32 %v146, %v302
    %v304 = vpop.f32.mrf.mxu0
    %305 = vmatprep.mubr.f32.mxu0 0.0
    %306 = vmatmul.mubr.f32.gmra.mxu0 %v176
    %v307 = vpop.f32.mrf.mxu0
    %v308 = vadd.f32 %v146, %v307
    %v309 = vpop.f32.mrf.mxu0
    %310 = vmatprep.mubr.f32.mxu0 0.0
    %311 = vmatmul.mubr.f32.gmra.mxu0 %v179
    %v312 = vpop.f32.mrf.mxu0
    %v313 = vadd.f32 %v146, %v312
    %v314 = vpop.f32.mrf.mxu0
    %315 = vmatprep.mubr.f32.mxu0 0.0
    %316 = vmatmul.mubr.f32.gmra.mxu0 %v182
    %v317 = vpop.f32.mrf.mxu0
    %v318 = vadd.f32 %v146, %v317
    %v319 = vpop.f32.mrf.mxu0
    %320 = vmatprep.mubr.f32.mxu0 0.0
    %321 = vmatmul.mubr.f32.gmra.mxu0 %v185
    %v322 = vpop.f32.mrf.mxu0
    %v323 = vadd.f32 %v146, %v322
    %v324 = vpop.f32.mrf.mxu0
    %325 = vmatprep.mubr.f32.mxu0 0.0
    %326 = vmatmul.mubr.f32.gmra.mxu0 %v188
    %v327 = vpop.f32.mrf.mxu0
    %v328 = vadd.f32 %v146, %v327
    %v329 = vpop.f32.mrf.mxu0
    %330 = vmatprep.mubr.f32.mxu0 0.0
    %331 = vmatmul.mubr.f32.gmra.mxu0 %v191
    %v332 = vpop.f32.mrf.mxu0
    %v333 = vadd.f32 %v146, %v332
    %v334 = vpop.f32.mrf.mxu0
    %335 = vmatprep.mubr.f32.mxu0 0.0
    %336 = vmatmul.mubr.f32.gmra.mxu0 %v194
    %v337 = vpop.f32.mrf.mxu0
    %v338 = vadd.f32 %v146, %v337
    %v339 = vpop.f32.mrf.mxu0
    %340 = vdwg.mxu0
    %v343 = vunpack.c.l.s4 1966171168
    %v344 = vunpack.c.0.s8 %v343
    %v345 = vlaneseq
    %v346 = vshrl.u32 %v345, 7
    %v347 = vsub.s32 %v344, %v346
    %v348 = vrot.slane %v138, %v347
    %v349 = vcombine.high %v348, %v348
    %v351 = vunpack.c.l.s4 1966171168
    %v352 = vunpack.c.0.s8 %v351
    %v353 = vlaneseq
    %v354 = vshrl.u32 %v353, 7
    %v355 = vsub.s32 %v352, %v354
    %v356 = vrot.slane %v348, %v355
    %v358 = vunpack.c.l.s4 1966171168
    %v359 = vunpack.c.0.s8 %v358
    %v360 = vlaneseq
    %v361 = vshrl.u32 %v360, 7
    %v362 = vsub.s32 %v359, %v361
    %v363 = vrot.slane %v349, %v362
    %v364 = vlaneseq
    %v365 = vshrl.u32 %v364, 7
    %v366 = vsub.s32 0, %v365
    %v367 = vrot.slane %v356, %v366
    %v368 = vlaneseq
    %v369 = vshrl.u32 %v368, 7
    %v370 = vsub.s32 0, %v369
    %v371 = vrot.slane %v363, %v370
    %v374 = vadd.f32 %v263, %v367
    %v375 = vadd.f32 %v268, %v367
    %v376 = vadd.f32 %v273, %v367
    %v377 = vadd.f32 %v278, %v367
    %v378 = vadd.f32 %v283, %v367
    %v379 = vadd.f32 %v288, %v367
    %v380 = vadd.f32 %v293, %v367
    %v381 = vadd.f32 %v298, %v367
    %v382 = vadd.f32 %v303, %v371
    %v383 = vadd.f32 %v308, %v371
    %v384 = vadd.f32 %v313, %v371
    %v385 = vadd.f32 %v318, %v371
    %v386 = vadd.f32 %v323, %v371
    %v387 = vadd.f32 %v328, %v371
    %v388 = vadd.f32 %v333, %v371
    %v389 = vadd.f32 %v338, %v371
    %v390 = vtanh.pop %v374
    %v391 = vtanh.pop %v375
    %v392 = vtanh.pop %v376
    %v393 = vtanh.pop %v377
    %v394 = vtanh.pop %v378
    %v395 = vtanh.pop %v379
    %v396 = vtanh.pop %v380
    %v397 = vtanh.pop %v381
    %v398 = vtanh.pop %v382
    %v399 = vtanh.pop %v383
    %v400 = vtanh.pop %v384
    %v401 = vtanh.pop %v385
    %v402 = vtanh.pop %v386
    %v403 = vtanh.pop %v387
    %v404 = vtanh.pop %v388
    %v405 = vtanh.pop %v389
    %v407 = vlaneseq
    %v408 = vshrl.u32 %v407, 7
    %v409 = vsub.s32 0, %v408
    %v410 = vrot.slane %v54, %v409
    %v412 = vmul.f32 %v390, %v410
    %v413 = vmul.f32 %v391, %v410
    %v414 = vmul.f32 %v392, %v410
    %v415 = vmul.f32 %v393, %v410
    %v416 = vmul.f32 %v394, %v410
    %v417 = vmul.f32 %v395, %v410
    %v418 = vmul.f32 %v396, %v410
    %v419 = vmul.f32 %v397, %v410
    %v420 = vmul.f32 %v398, %v410
    %v421 = vmul.f32 %v399, %v410
    %v422 = vmul.f32 %v400, %v410
    %v423 = vmul.f32 %v401, %v410
    %v424 = vmul.f32 %v402, %v410
    %v425 = vmul.f32 %v403, %v410
    %v426 = vmul.f32 %v404, %v410
    %v427 = vmul.f32 %v405, %v410
    %vm428 = vcmask 130048
    %v429 = vsel %vm428, %v412, 0.0
    %430 = vadd.xlane.f32.xlu0 %v429
    %v431 = vpop.xlane.xlu0 %430
    %v432 = vsel %vm428, %v413, 0.0
    %433 = vadd.xlane.f32.xlu0 %v432
    %v434 = vpop.xlane.xlu0 %433
    %v435 = vsel %vm428, %v414, 0.0
    %436 = vadd.xlane.f32.xlu0 %v435
    %v437 = vpop.xlane.xlu0 %436
    %v438 = vsel %vm428, %v415, 0.0
    %439 = vadd.xlane.f32.xlu0 %v438
    %v440 = vpop.xlane.xlu0 %439
    %v441 = vsel %vm428, %v416, 0.0
    %442 = vadd.xlane.f32.xlu0 %v441
    %v443 = vpop.xlane.xlu0 %442
    %v444 = vsel %vm428, %v417, 0.0
    %445 = vadd.xlane.f32.xlu0 %v444
    %v446 = vpop.xlane.xlu0 %445
    %v447 = vsel %vm428, %v418, 0.0
    %448 = vadd.xlane.f32.xlu0 %v447
    %v449 = vpop.xlane.xlu0 %448
    %v450 = vsel %vm428, %v419, 0.0
    %451 = vadd.xlane.f32.xlu0 %v450
    %v452 = vpop.xlane.xlu0 %451
    %v453 = vsel %vm428, %v420, 0.0
    %454 = vadd.xlane.f32.xlu0 %v453
    %v455 = vpop.xlane.xlu0 %454
    %v456 = vsel %vm428, %v421, 0.0
    %457 = vadd.xlane.f32.xlu0 %v456
    %v458 = vpop.xlane.xlu0 %457
    %v459 = vsel %vm428, %v422, 0.0
    %460 = vadd.xlane.f32.xlu0 %v459
    %v461 = vpop.xlane.xlu0 %460
    %v462 = vsel %vm428, %v423, 0.0
    %463 = vadd.xlane.f32.xlu0 %v462
    %v464 = vpop.xlane.xlu0 %463
    %v465 = vsel %vm428, %v424, 0.0
    %466 = vadd.xlane.f32.xlu0 %v465
    %v467 = vpop.xlane.xlu0 %466
    %v468 = vsel %vm428, %v425, 0.0
    %469 = vadd.xlane.f32.xlu0 %v468
    %v470 = vpop.xlane.xlu0 %469
    %v471 = vsel %vm428, %v426, 0.0
    %472 = vadd.xlane.f32.xlu0 %v471
    %v473 = vpop.xlane.xlu0 %472
    %v474 = vsel %vm428, %v427, 0.0
    %475 = vadd.xlane.f32.xlu0 %v474
    %v476 = vpop.xlane.xlu0 %475
    %s477 = sld [smem:[#allocation2]]
    %v478 = vstv %s477
    %v479 = vadd.f32 %v431, %v478
    %v480 = vadd.f32 %v434, %v478
    %v481 = vadd.f32 %v437, %v478
    %v482 = vadd.f32 %v440, %v478
    %v483 = vadd.f32 %v443, %v478
    %v484 = vadd.f32 %v446, %v478
    %v485 = vadd.f32 %v449, %v478
    %v486 = vadd.f32 %v452, %v478
    %v487 = vadd.f32 %v455, %v478
    %v488 = vadd.f32 %v458, %v478
    %v489 = vadd.f32 %v461, %v478
    %v490 = vadd.f32 %v464, %v478
    %v491 = vadd.f32 %v467, %v478
    %v492 = vadd.f32 %v470, %v478
    %v493 = vadd.f32 %v473, %v478
    %v494 = vadd.f32 %v476, %v478
    %v511 = vlaneseq
    %v512 = vand.u32 %v511, 127
    %v513 = vlaneseq
    %v514 = vshrl.u32 %v513, 7
    %v515 = vsub.s32 %v512, %v514
    %v516 = vrot.slane %v479, %v515
    %v517 = vadd.s32 %v512, 4294967288
    %v518 = vlaneseq
    %v519 = vshrl.u32 %v518, 7
    %v520 = vsub.s32 %v517, %v519
    %v521 = vrot.slane %v480, %v520
    %vm522 = vcmask 130112
    %v523 = vsel %vm522, %v521, %v516
    %v524 = vadd.s32 %v512, 4294967280
    %v525 = vlaneseq
    %v526 = vshrl.u32 %v525, 7
    %v527 = vsub.s32 %v524, %v526
    %v528 = vrot.slane %v481, %v527
    %vm529 = vcmask 195712
    %v530 = vsel %vm529, %v528, %v523
    %v531 = vadd.s32 %v512, 4294967272
    %v532 = vlaneseq
    %v533 = vshrl.u32 %v532, 7
    %v534 = vsub.s32 %v531, %v533
    %v535 = vrot.slane %v482, %v534
    %vm536 = vcmask 261312
    %v537 = vsel %vm536, %v535, %v530
    %v538 = vadd.s32 %v512, 4294967264
    %v539 = vlaneseq
    %v540 = vshrl.u32 %v539, 7
    %v541 = vsub.s32 %v538, %v540
    %v542 = vrot.slane %v483, %v541
    %vm543 = vcmask 326912
    %v544 = vsel %vm543, %v542, %v537
    %v545 = vadd.s32 %v512, 4294967256
    %v546 = vlaneseq
    %v547 = vshrl.u32 %v546, 7
    %v548 = vsub.s32 %v545, %v547
    %v549 = vrot.slane %v484, %v548
    %vm550 = vcmask 392512
    %v551 = vsel %vm550, %v549, %v544
    %v552 = vadd.s32 %v512, 4294967248
    %v553 = vlaneseq
    %v554 = vshrl.u32 %v553, 7
    %v555 = vsub.s32 %v552, %v554
    %v556 = vrot.slane %v485, %v555
    %vm557 = vcmask 458112
    %v558 = vsel %vm557, %v556, %v551
    %v559 = vadd.s32 %v512, 4294967240
    %v560 = vlaneseq
    %v561 = vshrl.u32 %v560, 7
    %v562 = vsub.s32 %v559, %v561
    %v563 = vrot.slane %v486, %v562
    %vm564 = vcmask 523712
    %v565 = vsel %vm564, %v563, %v558
    %v566 = vlaneseq
    %v567 = vshrl.u32 %v566, 7
    %v568 = vsub.s32 %v512, %v567
    %v569 = vrot.slane %v487, %v568
    %v570 = vlaneseq
    %v571 = vshrl.u32 %v570, 7
    %v572 = vsub.s32 %v517, %v571
    %v573 = vrot.slane %v488, %v572
    %v574 = vsel %vm522, %v573, %v569
    %v575 = vlaneseq
    %v576 = vshrl.u32 %v575, 7
    %v577 = vsub.s32 %v524, %v576
    %v578 = vrot.slane %v489, %v577
    %v579 = vsel %vm529, %v578, %v574
    %v580 = vlaneseq
    %v581 = vshrl.u32 %v580, 7
    %v582 = vsub.s32 %v531, %v581
    %v583 = vrot.slane %v490, %v582
    %v584 = vsel %vm536, %v583, %v579
    %v585 = vlaneseq
    %v586 = vshrl.u32 %v585, 7
    %v587 = vsub.s32 %v538, %v586
    %v588 = vrot.slane %v491, %v587
    %v589 = vsel %vm543, %v588, %v584
    %v590 = vlaneseq
    %v591 = vshrl.u32 %v590, 7
    %v592 = vsub.s32 %v545, %v591
    %v593 = vrot.slane %v492, %v592
    %v594 = vsel %vm550, %v593, %v589
    %v595 = vlaneseq
    %v596 = vshrl.u32 %v595, 7
    %v597 = vsub.s32 %v552, %v596
    %v598 = vrot.slane %v493, %v597
    %v599 = vsel %vm557, %v598, %v594
    %v600 = vlaneseq
    %v601 = vshrl.u32 %v600, 7
    %v602 = vsub.s32 %v559, %v601
    %v603 = vrot.slane %v494, %v602
    %v604 = vsel %vm564, %v603, %v599
    %vm605 = vcmask 1041409
    %v606 = vsel %vm605, %v604, %v565
    %vm608 = vcmask 517120
    %v609 = vsel %vm608, %v606, -inf
    %610 = vmax.xlane.f32.xlu0 %v609
    %v611 = vpop.xlane.xlu0 %610
    %v613 = vlaneseq
    %v614 = vshrl.u32 %v613, 7
    %v615 = vsub.s32 0, %v614
    %v616 = vrot.slane %v611, %v615
    %v617 = vlaneseq
    %v618 = vshrl.u32 %v617, 7
    %v619 = vsub.s32 1, %v618
    %v620 = vrot.slane %v611, %v619
    %v623 = vsub.f32 %v479, %v616
    %v624 = vsub.f32 %v480, %v616
    %v625 = vsub.f32 %v481, %v616
    %v626 = vsub.f32 %v482, %v616
    %v627 = vsub.f32 %v483, %v616
    %v628 = vsub.f32 %v484, %v616
    %v629 = vsub.f32 %v485, %v616
    %v630 = vsub.f32 %v486, %v616
    %v631 = vsub.f32 %v487, %v620
    %v632 = vsub.f32 %v488, %v620
    %v633 = vsub.f32 %v489, %v620
    %v634 = vsub.f32 %v490, %v620
    %v635 = vsub.f32 %v491, %v620
    %v636 = vsub.f32 %v492, %v620
    %v637 = vsub.f32 %v493, %v620
    %v638 = vsub.f32 %v494, %v620
    %v639 = vmul.f32 %v623, 1.442695
    %v640 = vpow.pop %v639
    %v641 = vmul.f32 %v624, 1.442695
    %v642 = vpow.pop %v641
    %v643 = vmul.f32 %v625, 1.442695
    %v644 = vpow.pop %v643
    %v645 = vmul.f32 %v626, 1.442695
    %v646 = vpow.pop %v645
    %v647 = vmul.f32 %v627, 1.442695
    %v648 = vpow.pop %v647
    %v649 = vmul.f32 %v628, 1.442695
    %v650 = vpow.pop %v649
    %v651 = vmul.f32 %v629, 1.442695
    %v652 = vpow.pop %v651
    %v653 = vmul.f32 %v630, 1.442695
    %v654 = vpow.pop %v653
    %v655 = vmul.f32 %v631, 1.442695
    %v656 = vpow.pop %v655
    %v657 = vmul.f32 %v632, 1.442695
    %v658 = vpow.pop %v657
    %v659 = vmul.f32 %v633, 1.442695
    %v660 = vpow.pop %v659
    %v661 = vmul.f32 %v634, 1.442695
    %v662 = vpow.pop %v661
    %v663 = vmul.f32 %v635, 1.442695
    %v664 = vpow.pop %v663
    %v665 = vmul.f32 %v636, 1.442695
    %v666 = vpow.pop %v665
    %v667 = vmul.f32 %v637, 1.442695
    %v668 = vpow.pop %v667
    %v669 = vmul.f32 %v638, 1.442695
    %v670 = vpow.pop %v669
    %687 = vset.pattern.permute.xlu0 0
    %688 = vperm.xlu0 %687, %v640
    %v689 = vpop.permute.xlu0 %688
    %690 = vset.pattern.permute.xlu0 0
    %691 = vperm.xlu0 %690, %v642
    %v692 = vpop.permute.xlu0 %691
    %693 = vset.pattern.permute.xlu0 0
    %694 = vperm.xlu0 %693, %v644
    %v695 = vpop.permute.xlu0 %694
    %696 = vset.pattern.permute.xlu0 0
    %697 = vperm.xlu0 %696, %v646
    %v698 = vpop.permute.xlu0 %697
    %699 = vset.pattern.permute.xlu0 0
    %700 = vperm.xlu0 %699, %v648
    %v701 = vpop.permute.xlu0 %700
    %702 = vset.pattern.permute.xlu0 0
    %703 = vperm.xlu0 %702, %v650
    %v704 = vpop.permute.xlu0 %703
    %705 = vset.pattern.permute.xlu0 0
    %706 = vperm.xlu0 %705, %v652
    %v707 = vpop.permute.xlu0 %706
    %708 = vset.pattern.permute.xlu0 0
    %709 = vperm.xlu0 %708, %v654
    %v710 = vpop.permute.xlu0 %709
    %711 = vset.pattern.permute.xlu0 0
    %712 = vperm.xlu0 %711, %v656
    %v713 = vpop.permute.xlu0 %712
    %714 = vset.pattern.permute.xlu0 0
    %715 = vperm.xlu0 %714, %v658
    %v716 = vpop.permute.xlu0 %715
    %717 = vset.pattern.permute.xlu0 0
    %718 = vperm.xlu0 %717, %v660
    %v719 = vpop.permute.xlu0 %718
    %720 = vset.pattern.permute.xlu0 0
    %721 = vperm.xlu0 %720, %v662
    %v722 = vpop.permute.xlu0 %721
    %723 = vset.pattern.permute.xlu0 0
    %724 = vperm.xlu0 %723, %v664
    %v725 = vpop.permute.xlu0 %724
    %726 = vset.pattern.permute.xlu0 0
    %727 = vperm.xlu0 %726, %v666
    %v728 = vpop.permute.xlu0 %727
    %729 = vset.pattern.permute.xlu0 0
    %730 = vperm.xlu0 %729, %v668
    %v731 = vpop.permute.xlu0 %730
    %732 = vset.pattern.permute.xlu0 0
    %733 = vperm.xlu0 %732, %v670
    %v734 = vpop.permute.xlu0 %733
    %v735 = vlaneseq
    %v736 = vshrl.u32 %v735, 7
    %v737 = vsub.s32 %v512, %v736
    %v738 = vrot.slane %v689, %v737
    %v739 = vlaneseq
    %v740 = vshrl.u32 %v739, 7
    %v741 = vsub.s32 %v517, %v740
    %v742 = vrot.slane %v692, %v741
    %v743 = vsel %vm522, %v742, %v738
    %v744 = vlaneseq
    %v745 = vshrl.u32 %v744, 7
    %v746 = vsub.s32 %v524, %v745
    %v747 = vrot.slane %v695, %v746
    %v748 = vsel %vm529, %v747, %v743
    %v749 = vlaneseq
    %v750 = vshrl.u32 %v749, 7
    %v751 = vsub.s32 %v531, %v750
    %v752 = vrot.slane %v698, %v751
    %v753 = vsel %vm536, %v752, %v748
    %v754 = vlaneseq
    %v755 = vshrl.u32 %v754, 7
    %v756 = vsub.s32 %v538, %v755
    %v757 = vrot.slane %v701, %v756
    %v758 = vsel %vm543, %v757, %v753
    %v759 = vlaneseq
    %v760 = vshrl.u32 %v759, 7
    %v761 = vsub.s32 %v545, %v760
    %v762 = vrot.slane %v704, %v761
    %v763 = vsel %vm550, %v762, %v758
    %v764 = vlaneseq
    %v765 = vshrl.u32 %v764, 7
    %v766 = vsub.s32 %v552, %v765
    %v767 = vrot.slane %v707, %v766
    %v768 = vsel %vm557, %v767, %v763
    %v769 = vlaneseq
    %v770 = vshrl.u32 %v769, 7
    %v771 = vsub.s32 %v559, %v770
    %v772 = vrot.slane %v710, %v771
    %v773 = vsel %vm564, %v772, %v768
    %v774 = vlaneseq
    %v775 = vshrl.u32 %v774, 7
    %v776 = vsub.s32 %v512, %v775
    %v777 = vrot.slane %v713, %v776
    %v778 = vlaneseq
    %v779 = vshrl.u32 %v778, 7
    %v780 = vsub.s32 %v517, %v779
    %v781 = vrot.slane %v716, %v780
    %v782 = vsel %vm522, %v781, %v777
    %v783 = vlaneseq
    %v784 = vshrl.u32 %v783, 7
    %v785 = vsub.s32 %v524, %v784
    %v786 = vrot.slane %v719, %v785
    %v787 = vsel %vm529, %v786, %v782
    %v788 = vlaneseq
    %v789 = vshrl.u32 %v788, 7
    %v790 = vsub.s32 %v531, %v789
    %v791 = vrot.slane %v722, %v790
    %v792 = vsel %vm536, %v791, %v787
    %v793 = vlaneseq
    %v794 = vshrl.u32 %v793, 7
    %v795 = vsub.s32 %v538, %v794
    %v796 = vrot.slane %v725, %v795
    %v797 = vsel %vm543, %v796, %v792
    %v798 = vlaneseq
    %v799 = vshrl.u32 %v798, 7
    %v800 = vsub.s32 %v545, %v799
    %v801 = vrot.slane %v728, %v800
    %v802 = vsel %vm550, %v801, %v797
    %v803 = vlaneseq
    %v804 = vshrl.u32 %v803, 7
    %v805 = vsub.s32 %v552, %v804
    %v806 = vrot.slane %v731, %v805
    %v807 = vsel %vm557, %v806, %v802
    %v808 = vlaneseq
    %v809 = vshrl.u32 %v808, 7
    %v810 = vsub.s32 %v559, %v809
    %v811 = vrot.slane %v734, %v810
    %v812 = vsel %vm564, %v811, %v807
    %v813 = vsel %vm605, %v812, %v773
    %v815 = vsel %vm608, %v813, 0.0
    %816 = vadd.xlane.f32.xlu0 %v815
    %v817 = vpop.xlane.xlu0 %816
    %v819 = vlaneseq
    %v820 = vshrl.u32 %v819, 7
    %v821 = vsub.s32 0, %v820
    %v822 = vrot.slane %v817, %v821
    %v823 = vlaneseq
    %v824 = vshrl.u32 %v823, 7
    %v825 = vsub.s32 1, %v824
    %v826 = vrot.slane %v817, %v825
    %v829 = vrcp.pop %v822
    %v830 = vmul.f32 %v640, %v829
    %v831 = vmul.f32 %v642, %v829
    %v832 = vmul.f32 %v644, %v829
    %v833 = vmul.f32 %v646, %v829
    %v834 = vmul.f32 %v648, %v829
    %v835 = vmul.f32 %v650, %v829
    %v836 = vmul.f32 %v652, %v829
    %v837 = vmul.f32 %v654, %v829
    %v838 = vrcp.pop %v826
    %v839 = vmul.f32 %v656, %v838
    %v840 = vmul.f32 %v658, %v838
    %v841 = vmul.f32 %v660, %v838
    %v842 = vmul.f32 %v662, %v838
    %v843 = vmul.f32 %v664, %v838
    %v844 = vmul.f32 %v666, %v838
    %v845 = vmul.f32 %v668, %v838
    %v846 = vmul.f32 %v670, %v838
    %848 = vset.pattern.permute.xlu0 0
    %849 = vperm.xlu0 %848, %v830
    %v850 = vpop.permute.xlu0 %849
    %853 = vset.pattern.permute.xlu0 0
    %854 = vperm.xlu0 %853, %v831
    %v855 = vpop.permute.xlu0 %854
    %858 = vset.pattern.permute.xlu0 0
    %859 = vperm.xlu0 %858, %v832
    %v860 = vpop.permute.xlu0 %859
    %863 = vset.pattern.permute.xlu0 0
    %864 = vperm.xlu0 %863, %v833
    %v865 = vpop.permute.xlu0 %864
    %868 = vset.pattern.permute.xlu0 0
    %869 = vperm.xlu0 %868, %v834
    %v870 = vpop.permute.xlu0 %869
    %873 = vset.pattern.permute.xlu0 0
    %874 = vperm.xlu0 %873, %v835
    %v875 = vpop.permute.xlu0 %874
    %878 = vset.pattern.permute.xlu0 0
    %879 = vperm.xlu0 %878, %v836
    %v880 = vpop.permute.xlu0 %879
    %883 = vset.pattern.permute.xlu0 0
    %884 = vperm.xlu0 %883, %v837
    %v885 = vpop.permute.xlu0 %884
    %888 = vset.pattern.permute.xlu0 0
    %889 = vperm.xlu0 %888, %v839
    %v890 = vpop.permute.xlu0 %889
    %893 = vset.pattern.permute.xlu0 0
    %894 = vperm.xlu0 %893, %v840
    %v895 = vpop.permute.xlu0 %894
    %898 = vset.pattern.permute.xlu0 0
    %899 = vperm.xlu0 %898, %v841
    %v900 = vpop.permute.xlu0 %899
    %903 = vset.pattern.permute.xlu0 0
    %904 = vperm.xlu0 %903, %v842
    %v905 = vpop.permute.xlu0 %904
    %908 = vset.pattern.permute.xlu0 0
    %909 = vperm.xlu0 %908, %v843
    %v910 = vpop.permute.xlu0 %909
    %913 = vset.pattern.permute.xlu0 0
    %914 = vperm.xlu0 %913, %v844
    %v915 = vpop.permute.xlu0 %914
    %918 = vset.pattern.permute.xlu0 0
    %919 = vperm.xlu0 %918, %v845
    %v920 = vpop.permute.xlu0 %919
    %923 = vset.pattern.permute.xlu0 0
    %924 = vperm.xlu0 %923, %v846
    %v925 = vpop.permute.xlu0 %924
    %v927 = vmul.f32 %v850, %v34
    %v928 = vmul.f32 %v855, %v35
    %v929 = vmul.f32 %v860, %v36
    %v930 = vmul.f32 %v865, %v37
    %v931 = vmul.f32 %v870, %v38
    %v932 = vmul.f32 %v875, %v39
    %v933 = vmul.f32 %v880, %v40
    %v934 = vmul.f32 %v885, %v41
    %v935 = vmul.f32 %v890, %v42
    %v936 = vmul.f32 %v895, %v43
    %v937 = vmul.f32 %v900, %v44
    %v938 = vmul.f32 %v905, %v45
    %v939 = vmul.f32 %v910, %v46
    %v940 = vmul.f32 %v915, %v47
    %v941 = vmul.f32 %v920, %v48
    %v942 = vmul.f32 %v925, %v49
    %v943 = vsel %vm67, %v927, 0.0
    %v944 = vsel %vm67, %v928, 0.0
    %v945 = vadd.f32 %v943, %v944
    %v946 = vsel %vm67, %v929, 0.0
    %v947 = vadd.f32 %v945, %v946
    %v948 = vsel %vm67, %v930, 0.0
    %v949 = vadd.f32 %v947, %v948
    %v950 = vsel %vm67, %v931, 0.0
    %v951 = vadd.f32 %v949, %v950
    %v952 = vsel %vm67, %v932, 0.0
    %v953 = vadd.f32 %v951, %v952
    %v954 = vsel %vm67, %v933, 0.0
    %v955 = vadd.f32 %v953, %v954
    %v956 = vsel %vm67, %v934, 0.0
    %v957 = vadd.f32 %v955, %v956
    %v958 = vrot.slane %v957, 4
    %v959 = vadd.f32 %v957, %v958
    %v960 = vrot.slane %v959, 2
    %v961 = vadd.f32 %v959, %v960
    %v962 = vrot.slane %v961, 1
    %v963 = vadd.f32 %v961, %v962
    %v964 = vsel %vm67, %v935, 0.0
    %v965 = vsel %vm67, %v936, 0.0
    %v966 = vadd.f32 %v964, %v965
    %v967 = vsel %vm67, %v937, 0.0
    %v968 = vadd.f32 %v966, %v967
    %v969 = vsel %vm67, %v938, 0.0
    %v970 = vadd.f32 %v968, %v969
    %v971 = vsel %vm67, %v939, 0.0
    %v972 = vadd.f32 %v970, %v971
    %v973 = vsel %vm67, %v940, 0.0
    %v974 = vadd.f32 %v972, %v973
    %v975 = vsel %vm67, %v941, 0.0
    %v976 = vadd.f32 %v974, %v975
    %v977 = vsel %vm67, %v942, 0.0
    %v978 = vadd.f32 %v976, %v977
    %v979 = vrot.slane %v978, 4
    %v980 = vadd.f32 %v978, %v979
    %v981 = vrot.slane %v980, 2
    %v982 = vadd.f32 %v980, %v981
    %v983 = vrot.slane %v982, 1
    %v984 = vadd.f32 %v982, %v983
    %v987 = vsel %vm605, %v984, %v963
    %vm989 = vcmask 254976
    %990 = vst.msk [vmem:[#allocation3] sm:$0x3] %vm989, %v987
    %v991 = vlaneseq
    %v992 = vshrl.u32 %v991, 7
    %v993 = vsub.s32 %v512, %v992
    %v994 = vrot.slane %v850, %v993
    %v995 = vlaneseq
    %v996 = vshrl.u32 %v995, 7
    %v997 = vsub.s32 %v517, %v996
    %v998 = vrot.slane %v855, %v997
    %v999 = vsel %vm522, %v998, %v994
    %v1000 = vlaneseq
    %v1001 = vshrl.u32 %v1000, 7
    %v1002 = vsub.s32 %v524, %v1001
    %v1003 = vrot.slane %v860, %v1002
    %v1004 = vsel %vm529, %v1003, %v999
    %v1005 = vlaneseq
    %v1006 = vshrl.u32 %v1005, 7
    %v1007 = vsub.s32 %v531, %v1006
    %v1008 = vrot.slane %v865, %v1007
    %v1009 = vsel %vm536, %v1008, %v1004
    %v1010 = vlaneseq
    %v1011 = vshrl.u32 %v1010, 7
    %v1012 = vsub.s32 %v538, %v1011
    %v1013 = vrot.slane %v870, %v1012
    %v1014 = vsel %vm543, %v1013, %v1009
    %v1015 = vlaneseq
    %v1016 = vshrl.u32 %v1015, 7
    %v1017 = vsub.s32 %v545, %v1016
    %v1018 = vrot.slane %v875, %v1017
    %v1019 = vsel %vm550, %v1018, %v1014
    %v1020 = vlaneseq
    %v1021 = vshrl.u32 %v1020, 7
    %v1022 = vsub.s32 %v552, %v1021
    %v1023 = vrot.slane %v880, %v1022
    %v1024 = vsel %vm557, %v1023, %v1019
    %v1025 = vlaneseq
    %v1026 = vshrl.u32 %v1025, 7
    %v1027 = vsub.s32 %v559, %v1026
    %v1028 = vrot.slane %v885, %v1027
    %v1029 = vsel %vm564, %v1028, %v1024
    %v1030 = vlaneseq
    %v1031 = vshrl.u32 %v1030, 7
    %v1032 = vsub.s32 %v512, %v1031
    %v1033 = vrot.slane %v890, %v1032
    %v1034 = vlaneseq
    %v1035 = vshrl.u32 %v1034, 7
    %v1036 = vsub.s32 %v517, %v1035
    %v1037 = vrot.slane %v895, %v1036
    %v1038 = vsel %vm522, %v1037, %v1033
    %v1039 = vlaneseq
    %v1040 = vshrl.u32 %v1039, 7
    %v1041 = vsub.s32 %v524, %v1040
    %v1042 = vrot.slane %v900, %v1041
    %v1043 = vsel %vm529, %v1042, %v1038
    %v1044 = vlaneseq
    %v1045 = vshrl.u32 %v1044, 7
    %v1046 = vsub.s32 %v531, %v1045
    %v1047 = vrot.slane %v905, %v1046
    %v1048 = vsel %vm536, %v1047, %v1043
    %v1049 = vlaneseq
    %v1050 = vshrl.u32 %v1049, 7
    %v1051 = vsub.s32 %v538, %v1050
    %v1052 = vrot.slane %v910, %v1051
    %v1053 = vsel %vm543, %v1052, %v1048
    %v1054 = vlaneseq
    %v1055 = vshrl.u32 %v1054, 7
    %v1056 = vsub.s32 %v545, %v1055
    %v1057 = vrot.slane %v915, %v1056
    %v1058 = vsel %vm550, %v1057, %v1053
    %v1059 = vlaneseq
    %v1060 = vshrl.u32 %v1059, 7
    %v1061 = vsub.s32 %v552, %v1060
    %v1062 = vrot.slane %v920, %v1061
    %v1063 = vsel %vm557, %v1062, %v1058
    %v1064 = vlaneseq
    %v1065 = vshrl.u32 %v1064, 7
    %v1066 = vsub.s32 %v559, %v1065
    %v1067 = vrot.slane %v925, %v1066
    %v1068 = vsel %vm564, %v1067, %v1063
    %v1069 = vsel %vm605, %v1068, %v1029
    %1071 = vst.msk [vmem:[#allocation5] sm:$0x3] %vm608, %v1069
    // Predicated region
    $region34: #{attention_forward.1} parent=1 // pred_check
      _
    $region35: #{attention_forward.1} parent=1 // pred_check_branch
      %1073 = sbr.rel (0) target = $region37
    $region36: #{attention_forward.1} parent=1 // pred_region
      %s1075 = ssub.s32 32, 32
      %1076 = vsyncadd [#allocation4], %s1075
      %s1078 = sshll.u32 [#allocation3], 4
      %s1079 = int_to_ptr.vmem [resolvable:$true] %s1078
      %1081 = dma.vmem_to_hbm [thread:$0]  %s1079, 32, %s8, [#allocation4]
    $region37: #{attention_forward.1} parent=1 // pred_fallthru
      _
    // Predicated region
    $region38: #{attention_forward.1} parent=1 // pred_check
      _
    $region39: #{attention_forward.1} parent=1 // pred_check_branch
      %1083 = sbr.rel (0) target = $region41
    $region40: #{attention_forward.1} parent=1 // pred_region
      %s1085 = ssub.s32 32, 32
      %1086 = vsyncadd [#allocation6], %s1085
      %s1088 = sshll.u32 [#allocation5], 4
      %s1089 = int_to_ptr.vmem [resolvable:$true] %s1088
      %1091 = dma.vmem_to_hbm [thread:$0]  %s1089, 32, %s9, [#allocation6]
    $region41: #{attention_forward.1} parent=1 // pred_fallthru
      _
    // Predicated region
    $region42: #{attention_forward.1} parent=1 // pred_check
      _
    $region43: #{attention_forward.1} parent=1 // pred_check_branch
      %1093 = sbr.rel (0) target = $region45
    $region44: #{attention_forward.1} parent=1 // pred_region
      %1094 = dma.done [#allocation4], 32
    $region45: #{attention_forward.1} parent=1 // pred_fallthru
      _
    // Predicated region
    $region46: #{attention_forward.1} parent=1 // pred_check
      _
    $region47: #{attention_forward.1} parent=1 // pred_check_branch
      %1096 = sbr.rel (0) target = $region49
    $region48: #{attention_forward.1} parent=1 // pred_region
      %1097 = dma.done [#allocation6], 32
    $region49: #{attention_forward.1} parent=1 // pred_fallthru
      _
    %1098 = vsyncpa [#allocation4], 1
    %1099 = vsyncpa [#allocation6], 1

</llo_original>
